<compile_context>
chip_gen: v6e
topology: v6e:2x2x1
jax: 0.10.0
libtpu: 0.0.40
codegen_flags: <defaults>
</compile_context>

<pallas_src>
import jax
import jax.numpy as jnp
from jax.experimental import pallas as pl
from jax.experimental.pallas import tpu as pltpu


# ----------------------------------------------------------------------------
# helpers: padding, tile selection, VMEM budgeting
# ----------------------------------------------------------------------------
def _round_up(v, m):
    return ((v + m - 1) // m) * m


def _pad2d(a, rows, cols):
    pr, pc = rows - a.shape[0], cols - a.shape[1]
    if pr or pc:
        a = jnp.pad(a, ((0, pr), (0, pc)))
    return a


def _choose_weight_tiles(K, N):
    # 1024-wide tiles (2 MiB bf16) amortize per-grid-step overhead and keep
    # weight streaming in large unmasked DMA bursts; working sets stay far
    # below physical VMEM on every generation (v5e/v6e 128 MiB, v7x 64 MiB).
    tn = min(1024, _round_up(N, 128))
    tk = min(1024, _round_up(K, 128))
    return tn, tk


def _choose_tm(M):
    # Multiples of 16 (bf16 sublane packing); prefer MXU-friendly 128/256/512.
    if M >= 512:
        return 512
    if M >= 256:
        return 256
    if M >= 128:
        return 128
    return _round_up(M, 16)


def _tile_bytes(shape, dtype):
    r, c = shape
    return _round_up(r, 8) * _round_up(c, 128) * jnp.dtype(dtype).itemsize


def _compiler_params(semantics, working_bytes):
    # Always set an explicit scoped-VMEM limit derived from the real
    # double-buffered working set (v5e's 16 MiB default sits right where the
    # large-tile working set lands); cap below v7x's 64 MiB physical VMEM.
    limit = int(min(max(2 * working_bytes, 24 * 1024 * 1024), 48 * 1024 * 1024))
    return pltpu.CompilerParams(dimension_semantics=semantics,
                                vmem_limit_bytes=limit)


# ----------------------------------------------------------------------------
# kernels
# ----------------------------------------------------------------------------
def _down_kernel(x_ref, w_down_ref, lx_ref, acc_ref):
    # Grid = (M tiles, K tiles); K innermost reduction with f32 accumulator.
    k = pl.program_id(1)

    @pl.when(k == 0)
    def _():
        acc_ref[...] = jnp.zeros_like(acc_ref)

    acc_ref[...] += jnp.dot(x_ref[...], w_down_ref[...],
                            preferred_element_type=jnp.float32)

    @pl.when(k == pl.num_programs(1) - 1)
    def _():
        lx_ref[...] = acc_ref[...].astype(lx_ref.dtype)


def _lora_fused_kernel(x_ref, w_org_ref, lx_ref, w_up_ref, o_ref, acc_ref):
    # Grid = (M tiles, N tiles, K tiles); K innermost reduction.
    # lx (precomputed down projection) and W_up (multiplier*scale folded in)
    # are tiny, lane-dense inputs consumed only at the final K step.
    k = pl.program_id(2)

    @pl.when(k == 0)
    def _():
        acc_ref[...] = jnp.zeros_like(acc_ref)

    acc_ref[...] += jnp.dot(x_ref[...], w_org_ref[...],
                            preferred_element_type=jnp.float32)

    @pl.when(k == pl.num_programs(2) - 1)
    def _():
        lora = jnp.dot(lx_ref[...], w_up_ref[...],
                       preferred_element_type=jnp.float32)
        o_ref[...] = (acc_ref[...] + lora).astype(o_ref.dtype)


def _matmul_kernel(x_ref, w_ref, o_ref, acc_ref):
    k = pl.program_id(2)

    @pl.when(k == 0)
    def _():
        acc_ref[...] = jnp.zeros_like(acc_ref)

    acc_ref[...] += jnp.dot(x_ref[...], w_ref[...],
                            preferred_element_type=jnp.float32)

    @pl.when(k == pl.num_programs(2) - 1)
    def _():
        o_ref[...] = acc_ref[...].astype(o_ref.dtype)


# ----------------------------------------------------------------------------
# one-time weight preparation (cache the result across forward calls)
# ----------------------------------------------------------------------------
def prepare_fused_params(w_org_t, w_down_t, w_up_t, *, multiplier, scale,
                         compute_dtype=jnp.bfloat16):
    """Weights pre-transposed: W_org^T [K,N], W_down^T [K,r], W_up^T [r,N]."""
    K, N = w_org_t.shape
    r = w_down_t.shape[1]
    assert w_down_t.shape[0] == K and w_up_t.shape == (r, N)
    coef = float(multiplier) * float(scale)
    tn, tk = _choose_weight_tiles(K, N)
    r_pad = _round_up(max(r, 1), 128)
    Kp, Np = _round_up(K, tk), _round_up(N, tn)
    return {
        "kind": "fused", "K": K, "N": N, "Kp": Kp, "Np": Np,
        "tk": tk, "tn": tn, "r_pad": r_pad, "compute_dtype": compute_dtype,
        "w_org": _pad2d(w_org_t, Kp, Np).astype(compute_dtype),
        "w_down": _pad2d(w_down_t, Kp, r_pad).astype(compute_dtype),
        # Fold multiplier*scale into the tiny up-projection weight once.
        "w_up": _pad2d(w_up_t * coef, r_pad, Np).astype(compute_dtype),
    }


def prepare_merged_params(w_org_t, w_down_t, w_up_t, *, multiplier, scale,
                          compute_dtype=jnp.bfloat16):
    K, N = w_org_t.shape
    coef = float(multiplier) * float(scale)
    w_merged = w_org_t.astype(jnp.float32) + coef * (
        w_down_t.astype(jnp.float32) @ w_up_t.astype(jnp.float32))
    tn, tk = _choose_weight_tiles(K, N)
    Kp, Np = _round_up(K, tk), _round_up(N, tn)
    return {
        "kind": "merged", "K": K, "N": N, "Kp": Kp, "Np": Np,
        "tk": tk, "tn": tn, "compute_dtype": compute_dtype,
        "w": _pad2d(w_merged, Kp, Np).astype(compute_dtype),
    }


# ----------------------------------------------------------------------------
# forward wrappers
# ----------------------------------------------------------------------------
def _down_projection(xc, w_down, *, tm, tk, r_pad, compute_dtype):
    Mp, Kp = xc.shape
    grid = (Mp // tm, Kp // tk)
    working = (2 * _tile_bytes((tm, tk), compute_dtype)
               + 2 * _tile_bytes((tk, r_pad), compute_dtype)
               + 2 * _tile_bytes((tm, r_pad), compute_dtype)
               + _tile_bytes((tm, r_pad), jnp.float32))
    return pl.pallas_call(
        _down_kernel,
        out_shape=jax.ShapeDtypeStruct((Mp, r_pad), compute_dtype),
        grid_spec=pltpu.PrefetchScalarGridSpec(
            num_scalar_prefetch=0,
            grid=grid,
            in_specs=[
                pl.BlockSpec((tm, tk), lambda i, k: (i, k)),
                pl.BlockSpec((tk, r_pad), lambda i, k: (k, 0)),
            ],
            out_specs=pl.BlockSpec((tm, r_pad), lambda i, k: (i, 0)),
            scratch_shapes=[pltpu.VMEM((tm, r_pad), jnp.float32)],
        ),
        compiler_params=_compiler_params(("parallel", "arbitrary"), working),
    )(xc, w_down)


def _lora_fused_forward_2d(x2d, prep):
    M, K = x2d.shape
    assert K == prep["K"]
    out_dtype = x2d.dtype
    cdt = prep["compute_dtype"]
    tk, tn, r_pad = prep["tk"], prep["tn"], prep["r_pad"]
    Kp, Np = prep["Kp"], prep["Np"]

    tm = _choose_tm(M)
    Mp = _round_up(M, tm)
    xc = _pad2d(x2d, Mp, Kp).astype(cdt)

    # Stage 1: lx = x @ W_down (rank-r, lane-dense r_pad=128 output).
    lx = _down_projection(xc, prep["w_down"], tm=tm, tk=tk, r_pad=r_pad,
                          compute_dtype=cdt)

    # Stage 2: org matmul + LoRA up projection, both grid output axes parallel.
    grid = (Mp // tm, Np // tn, Kp // tk)
    working = (2 * _tile_bytes((tm, tk), cdt)
               + 2 * _tile_bytes((tk, tn), cdt)
               + 2 * _tile_bytes((tm, r_pad), cdt)
               + 2 * _tile_bytes((r_pad, tn), cdt)
               + 2 * _tile_bytes((tm, tn), out_dtype)
               + _tile_bytes((tm, tn), jnp.float32))

    out = pl.pallas_call(
        _lora_fused_kernel,
        out_shape=jax.ShapeDtypeStruct((Mp, Np), out_dtype),
        grid_spec=pltpu.PrefetchScalarGridSpec(
            num_scalar_prefetch=0,
            grid=grid,
            in_specs=[
                pl.BlockSpec((tm, tk), lambda i, j, k: (i, k)),    # activations
                pl.BlockSpec((tk, tn), lambda i, j, k: (k, j)),    # W_org tile
                pl.BlockSpec((tm, r_pad), lambda i, j, k: (i, 0)),  # lx
                pl.BlockSpec((r_pad, tn), lambda i, j, k: (0, j)),  # scaled W_up
            ],
            out_specs=pl.BlockSpec((tm, tn), lambda i, j, k: (i, j)),
            scratch_shapes=[pltpu.VMEM((tm, tn), jnp.float32)],
        ),
        compiler_params=_compiler_params(
            ("parallel", "parallel", "arbitrary"), working),
    )(xc, prep["w_org"], lx, prep["w_up"])

    return out[:M, :prep["N"]]


def _lora_merged_forward_2d(x2d, prep):
    M, K = x2d.shape
    assert K == prep["K"]
    out_dtype = x2d.dtype
    cdt = prep["compute_dtype"]
    tk, tn = prep["tk"], prep["tn"]
    Kp, Np = prep["Kp"], prep["Np"]

    tm = _choose_tm(M)
    Mp = _round_up(M, tm)
    xc = _pad2d(x2d, Mp, Kp).astype(cdt)

    grid = (Mp // tm, Np // tn, Kp // tk)
    working = (2 * _tile_bytes((tm, tk), cdt)
               + 2 * _tile_bytes((tk, tn), cdt)
               + 2 * _tile_bytes((tm, tn), out_dtype)
               + _tile_bytes((tm, tn), jnp.float32))

    out = pl.pallas_call(
        _matmul_kernel,
        out_shape=jax.ShapeDtypeStruct((Mp, Np), out_dtype),
        grid_spec=pltpu.PrefetchScalarGridSpec(
            num_scalar_prefetch=0,
            grid=grid,
            in_specs=[
                pl.BlockSpec((tm, tk), lambda i, j, k: (i, k)),
                pl.BlockSpec((tk, tn), lambda i, j, k: (k, j)),
            ],
            out_specs=pl.BlockSpec((tm, tn), lambda i, j, k: (i, j)),
            scratch_shapes=[pltpu.VMEM((tm, tn), jnp.float32)],
        ),
        compiler_params=_compiler_params(
            ("parallel", "parallel", "arbitrary"), working),
    )(xc, prep["w"])

    return out[:M, :prep["N"]]


def lora_inf_module_forward(x, prep):
    """x: [B, S, in_dim] -> [B, S, out_dim]. `prep` is from prepare_*_params
    (one-time weight prep; cache it across calls). Inference mode, so
    dropout / rank_dropout / module_dropout are inactive."""
    B, S, K = x.shape
    x2d = x.reshape(B * S, K)
    if prep["kind"] == "merged":
        out2d = _lora_merged_forward_2d(x2d, prep)
    else:
        out2d = _lora_fused_forward_2d(x2d, prep)
    return out2d.reshape(B, S, -1)


def _reference(x, w_org_t, w_down_t, w_up_t, *, multiplier, scale):
    org = jnp.einsum("bsk,kn->bsn", x, w_org_t)
    lx = jnp.einsum("bsk,kr->bsr", x, w_down_t)
    up = jnp.einsum("bsr,rn->bsn", lx, w_up_t)
    return org + up * (multiplier * scale)


if __name__ == "__main__":
    # Small shapes consistent with the Linear branch of LoRAInfModule.
    B, S = 2, 8
    in_dim, out_dim = 32, 64
    lora_dim = 4
    alpha = 1.0
    multiplier = 1.0
    scale = alpha / lora_dim  # self.scale = alpha / lora_dim

    key = jax.random.PRNGKey(0)
    kx, ko, kd, ku = jax.random.split(key, 4)

    x = jax.random.normal(kx, (B, S, in_dim), dtype=jnp.float32)

    # PyTorch stores Linear weights as [out, in]; we keep transposed [in, out].
    w_org_t = jax.random.normal(ko, (in_dim, out_dim), dtype=jnp.float32) * 0.05
    w_down_t = jax.random.normal(kd, (in_dim, lora_dim), dtype=jnp.float32) * 0.05
    # NOTE: PyTorch zero-inits lora_up; use small nonzero values so the LoRA
    # branch of the kernel is actually exercised numerically.
    w_up_t = jax.random.normal(ku, (lora_dim, out_dim), dtype=jnp.float32) * 0.05

    ref = _reference(x, w_org_t, w_down_t, w_up_t,
                     multiplier=multiplier, scale=scale)

    # One-time weight preparation (cached across forward calls in practice).
    prep_fused = prepare_fused_params(w_org_t, w_down_t, w_up_t,
                                      multiplier=multiplier, scale=scale)
    prep_merged = prepare_merged_params(w_org_t, w_down_t, w_up_t,
                                        multiplier=multiplier, scale=scale)

    # Fused LoRA path (bf16 compute, f32 accumulation).
    out_fused = lora_inf_module_forward(x, prep_fused)
    out_fused = jax.block_until_ready(out_fused)
    assert out_fused.shape == (B, S, out_dim)
    assert jnp.allclose(out_fused, ref, atol=5e-2, rtol=5e-2), "fused path mismatch"

    # Merged-weight inference fast path.
    out_merged = lora_inf_module_forward(x, prep_merged)
    out_merged = jax.block_until_ready(out_merged)
    assert out_merged.shape == (B, S, out_dim)
    assert jnp.allclose(out_merged, ref, atol=5e-2, rtol=5e-2), "merged path mismatch"

    # TODO(synk): Conv2d branch of LoRAInfModule (lora_down as KxK conv,
    # lora_up as 1x1 conv) not implemented here; only the Linear branch is.
    print("KERNEL_OK")
</pallas_src>

<mosaic_0001>
module attributes {stable_mosaic.version = 11 : i64} {
  func.func @_down_kernel(%arg0: i32, %arg1: i32, %arg2: memref<16x128xbf16, #tpu.memory_space<vmem>>, %arg3: memref<128x128xbf16, #tpu.memory_space<vmem>>, %arg4: memref<16x128xbf16, #tpu.memory_space<vmem>>, %arg5: memref<16x128xf32, #tpu.memory_space<vmem>>) attributes {dimension_semantics = [#tpu.dimension_semantics<parallel>, #tpu.dimension_semantics<arbitrary>], iteration_bounds = array<i64: 1, 1>, scalar_prefetch = 0 : i64, scratch_operands = 1 : i64, tpu.core_type = #tpu.core_type<tc>, window_params = [{transform_indices = @transform_0, window_bounds = array<i64: 16, 128>}, {transform_indices = @transform_1, window_bounds = array<i64: 128, 128>}, {transform_indices = @transform_2, window_bounds = array<i64: 16, 128>}]} {
    %c0_i32 = arith.constant 0 : i32
    %0 = arith.cmpi eq, %arg1, %c0_i32 : i32
    %1 = arith.extui %0 : i1 to i32
    %c0_i32_0 = arith.constant 0 : i32
    %2 = arith.cmpi ne, %1, %c0_i32_0 : i32
    scf.if %2 {
      %cst_10 = arith.constant 0.000000e+00 : f32
      %12 = vector.broadcast %cst_10 : f32 to vector<16x128xf32>
      %c0_11 = arith.constant 0 : index
      %c0_12 = arith.constant 0 : index
      %13 = vector.load %arg5[%c0_11, %c0_12] : memref<16x128xf32, #tpu.memory_space<vmem>>, vector<16x128xf32>
      tpu.vector_store %arg5[%c0_11, %c0_12], %12 {strides = array<i32>} : memref<16x128xf32, #tpu.memory_space<vmem>>, vector<16x128xf32>,
    } else {
    }
    %c0 = arith.constant 0 : index
    %c0_1 = arith.constant 0 : index
    %3 = vector.load %arg5[%c0, %c0_1] : memref<16x128xf32, #tpu.memory_space<vmem>>, vector<16x128xf32>
    %c0_2 = arith.constant 0 : index
    %c0_3 = arith.constant 0 : index
    %4 = vector.load %arg2[%c0_2, %c0_3] : memref<16x128xbf16, #tpu.memory_space<vmem>>, vector<16x128xbf16>
    %c0_4 = arith.constant 0 : index
    %c0_5 = arith.constant 0 : index
    %5 = vector.load %arg3[%c0_4, %c0_5] : memref<128x128xbf16, #tpu.memory_space<vmem>>, vector<128x128xbf16>
    %cst = arith.constant dense<0.000000e+00> : vector<16x128xf32>
    %6 = tpu.matmul %4, %5, %cst {dimension_numbers = #tpu.dot_dimension_numbers<[1], [0], [0], [1], [0, 0, 1, 1], [], []>} : vector<16x128xbf16>, vector<128x128xbf16>, vector<16x128xf32> -> vector<16x128xf32>
    %7 = arith.addf %3, %6 : vector<16x128xf32>
    %c0_6 = arith.constant 0 : index
    %c0_7 = arith.constant 0 : index
    %8 = vector.load %arg5[%c0_6, %c0_7] : memref<16x128xf32, #tpu.memory_space<vmem>>, vector<16x128xf32>
    tpu.vector_store %arg5[%c0_6, %c0_7], %7 {strides = array<i32>} : memref<16x128xf32, #tpu.memory_space<vmem>>, vector<16x128xf32>,
    %c0_i32_8 = arith.constant 0 : i32
    %9 = arith.cmpi eq, %arg1, %c0_i32_8 : i32
    %10 = arith.extui %9 : i1 to i32
    %c0_i32_9 = arith.constant 0 : i32
    %11 = arith.cmpi ne, %10, %c0_i32_9 : i32
    scf.if %11 {
      %c0_10 = arith.constant 0 : index
      %c0_11 = arith.constant 0 : index
      %12 = vector.load %arg5[%c0_10, %c0_11] : memref<16x128xf32, #tpu.memory_space<vmem>>, vector<16x128xf32>
      %13 = arith.truncf %12 : vector<16x128xf32> to vector<16x128xbf16>
      %c0_12 = arith.constant 0 : index
      %c0_13 = arith.constant 0 : index
      %14 = vector.load %arg4[%c0_12, %c0_13] : memref<16x128xbf16, #tpu.memory_space<vmem>>, vector<16x128xbf16>
      tpu.vector_store %arg4[%c0_12, %c0_13], %13 {strides = array<i32>} : memref<16x128xbf16, #tpu.memory_space<vmem>>, vector<16x128xbf16>,
    } else {
    }
    return
  }
  func.func @transform_0(%arg0: i32, %arg1: i32) -> (i32, i32) {
    %c0_i32 = arith.constant 0 : i32
    return %arg0, %arg1 : i32, i32
  }
  func.func @transform_1(%arg0: i32, %arg1: i32) -> (i32, i32) {
    %c0_i32 = arith.constant 0 : i32
    %c0_i32_0 = arith.constant 0 : i32
    return %arg1, %c0_i32 : i32, i32
  }
  func.func @transform_2(%arg0: i32, %arg1: i32) -> (i32, i32) {
    %c0_i32 = arith.constant 0 : i32
    %c0_i32_0 = arith.constant 0 : i32
    return %arg0, %c0_i32 : i32, i32
  }
}

</mosaic_0001>

<llo_original>
// kernel: tpu_custom_call.1
$region0: #{tpu_custom_call.1}
  #allocation0 [shape = 'u32[]', space=smem, size = 0x4, offset = 0x4, fixed_abs, tag = 'smem constant byte address 0x4 - core index']
  #allocation1 [shape = 'u32[144,128]{1,0:T(1,128)}', space=vmem, size = 0x12000, scoped, tag = 'internal scratch']
  #allocation2 [shape = 'f32[16,128]{1,0:T(8,128)}', space=vmem, size = 0x2000, scoped, tag = 'scratch operand']
  %s0 = inlined_call_operand.hbm [shape: bf16[16,128], index: 0, kind: input, shape index: {}]
  %s1 = inlined_call_operand.hbm [shape: bf16[128,128], index: 1, kind: input, shape index: {}]
  %s2 = inlined_call_operand.hbm [shape: bf16[16,128], index: 2, kind: output, shape index: {}]
  %s3 = sld [smem:[#allocation0]]
  $region34: #{tpu_custom_call.1} parent=0
    _
  %s5 = ssub.s32 1, %s3
  %s6 = scalar_select 0, %s5, %s3
  $region1: #{tpu_custom_call.1} parent=0
    #allocation3 [shape = 'u8[4096]{0}', space=vmem, size = 0x1000, scoped, tag = 'input window, operand 0, single buffered']
    #allocation4 [shape = 's32[1]{0}', space=sflag, size = 0x4, scoped, tag = 'scoped memory for tpu_custom_call.1']
    #allocation5 [shape = 's32[1]{0}', space=sflag, size = 0x4, scoped, tag = 'scoped memory for tpu_custom_call.1']
    #allocation6 [shape = 'u8[32768]{0}', space=vmem, size = 0x8000, scoped, tag = 'input window, operand 1, single buffered']
    #allocation7 [shape = 's32[1]{0}', space=sflag, size = 0x4, scoped, tag = 'scoped memory for tpu_custom_call.1']
    #allocation8 [shape = 'u8[4096]{0}', space=vmem, size = 0x1000, scoped, tag = 'output window, operand 0, single buffered']
    %7 = vsyncpa [#allocation4], 0
    %8 = vsyncpa [#allocation7], 0
    %9 = vsyncpa [#allocation5], 0
    // Predicated region
    $region2: #{tpu_custom_call.1} parent=1 // pred_check
      _
    $region3: #{tpu_custom_call.1} parent=1 // pred_check_branch
      %11 = sbr.rel (0) target = $region5
    $region4: #{tpu_custom_call.1} parent=1 // pred_region
      %s13 = ssub.s32 128, 128
      %14 = vsyncadd [#allocation4], %s13
      %s15 = sshll.u32 [#allocation3], 4
      %s16 = int_to_ptr.vmem [resolvable:$true] %s15
      %21 = dma.hbm_to_vmem [thread:$0]  %s0, 128, %s16, [#allocation4], 64, 64, 4
    $region5: #{tpu_custom_call.1} parent=1 // pred_fallthru
      _
    // Predicated region
    $region6: #{tpu_custom_call.1} parent=1 // pred_check
      _
    $region7: #{tpu_custom_call.1} parent=1 // pred_check_branch
      %23 = sbr.rel (0) target = $region9
    $region8: #{tpu_custom_call.1} parent=1 // pred_region
      %s25 = ssub.s32 1024, 1024
      %26 = vsyncadd [#allocation7], %s25
      %s27 = sshll.u32 [#allocation6], 4
      %s28 = int_to_ptr.vmem [resolvable:$true] %s27
      %33 = dma.hbm_to_vmem [thread:$0]  %s1, 1024, %s28, [#allocation7], 64, 64, 4
    $region9: #{tpu_custom_call.1} parent=1 // pred_fallthru
      _
    // Predicated region
    $region10: #{tpu_custom_call.1} parent=1 // pred_check
      _
    $region11: #{tpu_custom_call.1} parent=1 // pred_check_branch
      %35 = sbr.rel (0) target = $region13
    $region12: #{tpu_custom_call.1} parent=1 // pred_region
      %36 = dma.done [#allocation4], 128
    $region13: #{tpu_custom_call.1} parent=1 // pred_fallthru
      _
    // Predicated region
    $region14: #{tpu_custom_call.1} parent=1 // pred_check
      _
    $region15: #{tpu_custom_call.1} parent=1 // pred_check_branch
      %38 = sbr.rel (0) target = $region17
    $region16: #{tpu_custom_call.1} parent=1 // pred_region
      %39 = dma.done [#allocation7], 1024
    $region17: #{tpu_custom_call.1} parent=1 // pred_fallthru
      _
    %p41 = scmp.eq.s32.totalorder 0, 0
    // Predicated region
    $region18: #{tpu_custom_call.1} parent=1 // pred_check
      %p42 = pneg %p41
    $region19: #{tpu_custom_call.1} parent=1 // pred_check_branch
      %44 = sbr.rel (%p42) target = $region21
    $region20: #{tpu_custom_call.1} parent=1 // pred_region
      %45 = vst [vmem:[#allocation2] sm:$0xff] 0.0
      %46 = vst [vmem:[#allocation2 + $0x8] sm:$0xff] 0.0
    $region21: #{tpu_custom_call.1} parent=1 // pred_fallthru
      _
    %v47 = vld [vmem:[#allocation2] sm:$0xff]
    %v48 = vld [vmem:[#allocation2 + $0x8] sm:$0xff]
    %v49 = vld [vmem:[#allocation3] sm:$0xf]
    %v50 = vld [vmem:[#allocation3 + $0x4] sm:$0xf]
    %v51 = vld [vmem:[#allocation6] sm:$0xf]
    %v52 = vld [vmem:[#allocation6 + $0x4] sm:$0xf]
    %v53 = vld [vmem:[#allocation6 + $0x8] sm:$0xf]
    %v54 = vld [vmem:[#allocation6 + $0xc] sm:$0xf]
    %v55 = vld [vmem:[#allocation6 + $0x10] sm:$0xf]
    %v56 = vld [vmem:[#allocation6 + $0x14] sm:$0xf]
    %v57 = vld [vmem:[#allocation6 + $0x18] sm:$0xf]
    %v58 = vld [vmem:[#allocation6 + $0x1c] sm:$0xf]
    %v59 = vld [vmem:[#allocation6 + $0x20] sm:$0xf]
    %v60 = vld [vmem:[#allocation6 + $0x24] sm:$0xf]
    %v61 = vld [vmem:[#allocation6 + $0x28] sm:$0xf]
    %v62 = vld [vmem:[#allocation6 + $0x2c] sm:$0xf]
    %v63 = vld [vmem:[#allocation6 + $0x30] sm:$0xf]
    %v64 = vld [vmem:[#allocation6 + $0x34] sm:$0xf]
    %v65 = vld [vmem:[#allocation6 + $0x38] sm:$0xf]
    %v66 = vld [vmem:[#allocation6 + $0x3c] sm:$0xf]
    %v69 = vunpack.c.l.b16 %v49
    %v70 = vunpack.c.l.b16 %v50
    %v71 = vpack.c.b16 %v70, %v69
    %v89 = vunpack.c.l.b16 %v51
    %v90 = vunpack.c.l.b16 %v52
    %v91 = vunpack.c.l.b16 %v53
    %v92 = vunpack.c.l.b16 %v54
    %v93 = vunpack.c.l.b16 %v55
    %v94 = vunpack.c.l.b16 %v56
    %v95 = vunpack.c.l.b16 %v57
    %v96 = vunpack.c.l.b16 %v58
    %v97 = vunpack.c.l.b16 %v59
    %v98 = vunpack.c.l.b16 %v60
    %v99 = vunpack.c.l.b16 %v61
    %v100 = vunpack.c.l.b16 %v62
    %v101 = vunpack.c.l.b16 %v63
    %v102 = vunpack.c.l.b16 %v64
    %v103 = vunpack.c.l.b16 %v65
    %v104 = vunpack.c.l.b16 %v66
    %v105 = vpack.c.b16 %v90, %v89
    %v106 = vpack.c.b16 %v92, %v91
    %v107 = vpack.c.b16 %v94, %v93
    %v108 = vpack.c.b16 %v96, %v95
    %v109 = vpack.c.b16 %v98, %v97
    %v110 = vpack.c.b16 %v100, %v99
    %v111 = vpack.c.b16 %v102, %v101
    %v112 = vpack.c.b16 %v104, %v103
    %121 = vmatprep.subr.bf16.mxu0 0
    %122 = vmatpush1.bf16.msra.mxu0 %v112
    %123 = vmatprep.subr.bf16.mxu0 0
    %124 = vmatpush1.bf16.msra.mxu0 %v111
    %125 = vmatprep.subr.bf16.mxu0 0
    %126 = vmatpush1.bf16.msra.mxu0 %v110
    %127 = vmatprep.subr.bf16.mxu0 0
    %128 = vmatpush1.bf16.msra.mxu0 %v109
    %129 = vmatprep.subr.bf16.mxu0 0
    %130 = vmatpush1.bf16.msra.mxu0 %v108
    %131 = vmatprep.subr.bf16.mxu0 0
    %132 = vmatpush1.bf16.msra.mxu0 %v107
    %133 = vmatprep.subr.bf16.mxu0 0
    %134 = vmatpush1.bf16.msra.mxu0 %v106
    %135 = vmatprep.subr.bf16.mxu0 0
    %136 = vmatpush1.bf16.msra.mxu0 %v105
    %137 = vmatprep.subr.bf16.mxu0 0
    %138 = vmatpush2.bf16.msra.mxu0 0
    %139 = vmatprep.subr.bf16.mxu0 0
    %140 = vmatpush2.bf16.msra.mxu0 0
    %141 = vmatprep.subr.bf16.mxu0 0
    %142 = vmatpush2.bf16.msra.mxu0 0
    %143 = vmatprep.subr.bf16.mxu0 0
    %144 = vmatpush2.bf16.msra.mxu0 0
    %145 = vmatprep.subr.bf16.mxu0 0
    %146 = vmatpush2.bf16.msra.mxu0 0
    %147 = vmatprep.subr.bf16.mxu0 0
    %148 = vmatpush2.bf16.msra.mxu0 0
    %149 = vmatprep.subr.bf16.mxu0 0
    %150 = vmatpush2.bf16.msra.mxu0 0
    %151 = vmatprep.subr.bf16.mxu0 0
    %152 = vmatpush2.bf16.msra.mxu0 0
    %153 = vmatprep.mubr.bf16.mxu0 0
    %154 = vmatmul.mubr.bf16.gmra.mxu0 %v71
    %v155 = vpop.f32.mrf.mxu0
    %v156 = vadd.f32 0.0, %v155
    %v157 = vpop.f32.mrf.mxu0
    %v158 = vpop.f32.mrf.mxu0
    %v159 = vadd.f32 0.0, %v158
    %v160 = vpop.f32.mrf.mxu0
    %161 = vdwg.mxu0
    %v162 = vadd.f32 %v47, %v156
    %v163 = vadd.f32 %v48, %v159
    %164 = vst [vmem:[#allocation2] sm:$0xff] %v162
    %165 = vst [vmem:[#allocation2 + $0x8] sm:$0xff] %v163
    // Predicated region
    $region22: #{tpu_custom_call.1} parent=1 // pred_check
      %p166 = pneg %p41
    $region23: #{tpu_custom_call.1} parent=1 // pred_check_branch
      %168 = sbr.rel (%p166) target = $region25
    $region24: #{tpu_custom_call.1} parent=1 // pred_region
      %v169 = vld [vmem:[#allocation2] sm:$0xff]
      %v170 = vld [vmem:[#allocation2 + $0x8] sm:$0xff]
      %v171 = vpack.c.bf16 %v170, %v169
      %v173 = vunpack.c.l.b16 %v171
      %v174 = vunpack.c.h.b16 %v171
      %v175 = vpack.c.b16 %v173, %v173
      %v176 = vpack.c.b16 %v174, %v174
      %179 = vst [vmem:[#allocation8] sm:$0xf] %v175
      %180 = vst [vmem:[#allocation8 + $0x4] sm:$0xf] %v176
    $region25: #{tpu_custom_call.1} parent=1 // pred_fallthru
      _
    // Predicated region
    $region26: #{tpu_custom_call.1} parent=1 // pred_check
      _
    $region27: #{tpu_custom_call.1} parent=1 // pred_check_branch
      %182 = sbr.rel (0) target = $region29
    $region28: #{tpu_custom_call.1} parent=1 // pred_region
      %s184 = ssub.s32 128, 128
      %185 = vsyncadd [#allocation5], %s184
      %s186 = sshll.u32 [#allocation8], 4
      %s187 = int_to_ptr.vmem [resolvable:$true] %s186
      %192 = dma.vmem_to_hbm [thread:$0]  %s187, 128, %s2, [#allocation5], 64, 64, 4
    $region29: #{tpu_custom_call.1} parent=1 // pred_fallthru
      _
    // Predicated region
    $region30: #{tpu_custom_call.1} parent=1 // pred_check
      _
    $region31: #{tpu_custom_call.1} parent=1 // pred_check_branch
      %194 = sbr.rel (0) target = $region33
    $region32: #{tpu_custom_call.1} parent=1 // pred_region
      %195 = dma.done [#allocation5], 128
    $region33: #{tpu_custom_call.1} parent=1 // pred_fallthru
      _
    %196 = vsyncpa [#allocation4], 1
    %197 = vsyncpa [#allocation7], 1
    %198 = vsyncpa [#allocation5], 1

</llo_original>
